<compile_context>
chip_gen: v6e
topology: v6e:2x2x1
jax: 0.10.0
libtpu: 0.0.40
codegen_flags: <defaults>
</compile_context>

<pallas_src>
import math

import jax
import jax.numpy as jnp
from jax.experimental import pallas as pl
from jax.experimental.pallas import tpu as pltpu

LAYER_DIMS = [64, 32, 16, 8, 4, 1]   # output dims of the 6 Linear layers
H = 128                              # lane-padded hidden width


def _round_up(n, m):
    return ((n + m - 1) // m) * m


def _mlp_kernel(x_ref, w1_ref, wh_ref, w6_ref, bh_ref, o_ref):
    """Whole MLP forward for one batch tile, all resident in VMEM.

    x_ref : (bt, input_dim)  bf16
    w1_ref: (input_dim, 128) bf16   (layer 1, output cols zero-padded to 128)
    wh_ref: (4, 128, 128)    bf16   (layers 2..5, zero-padded to 128x128)
    w6_ref: (1, 128)         bf16   (layer 6 stored as a row, cols >=4 are zero)
    bh_ref: (6, 128)         f32    (rows 0..4 = padded biases b1..b5, [5,0] = b6)
    o_ref : (1, bt)          f32    (lane-dense output row for this tile)
    """
    # Layer 1: (bt, in) @ (in, 128) -> f32 accumulate, bias + ReLU, back to bf16.
    h = jnp.dot(x_ref[...], w1_ref[...], preferred_element_type=jnp.float32)
    h = jnp.maximum(h + bh_ref[0:1, :], 0.0).astype(jnp.bfloat16)

    # Layers 2-5: padded (128,128) weights; padded columns stay exactly zero
    # (zero weight cols + zero bias -> ReLU(0) = 0), so results are unchanged.
    for i in range(4):
        h = jnp.dot(h, wh_ref[i], preferred_element_type=jnp.float32)
        h = jnp.maximum(h + bh_ref[i + 1:i + 2, :], 0.0).astype(jnp.bfloat16)

    # Final layer as an NT dot (contract both last dims):
    #   (1, 128) x (bt, 128) -> (1, bt), i.e. the result comes out already
    # transposed into the lane axis -> unmasked, lane-dense store.
    out = jax.lax.dot_general(
        w6_ref[...], h, (((1,), (1,)), ((), ())),
        preferred_element_type=jnp.float32)
    o_ref[...] = out + bh_ref[5:6, 0:1]


def pack_params(params):
    """params: list of 6 (w, b) in PyTorch convention, w (out,in) f32, b (out,) f32.

    Returns (w1p, whp, w6r, bh) packed/padded, weights bf16, biases f32."""
    (w1, b1), (w2, b2), (w3, b3), (w4, b4), (w5, b5), (w6, b6) = params
    input_dim = w1.shape[1]

    w1p = jnp.zeros((input_dim, H), jnp.float32).at[:, :w1.shape[0]].set(w1.T)
    w1p = w1p.astype(jnp.bfloat16)

    blocks = []
    for w in (w2, w3, w4, w5):
        o, i = w.shape
        blocks.append(jnp.zeros((H, H), jnp.float32).at[:i, :o].set(w.T))
    whp = jnp.stack(blocks).astype(jnp.bfloat16)          # (4, 128, 128)

    w6r = jnp.zeros((1, H), jnp.float32).at[0, :w6.shape[1]].set(w6[0])
    w6r = w6r.astype(jnp.bfloat16)                         # (1, 128)

    bh = jnp.zeros((6, H), jnp.float32)
    for r, b in enumerate((b1, b2, b3, b4, b5)):
        bh = bh.at[r, :b.shape[0]].set(b)
    bh = bh.at[5, 0].set(b6[0])                            # (6, 128)
    return w1p, whp, w6r, bh


def my_model2_forward(x, params, *, batch_tile=1024):
    """x: (B, input_dim) float array. params: PyTorch-convention (w,b) list."""
    B, input_dim = x.shape

    # Choose a lane-aligned batch tile; keep >=2 grid steps when the batch
    # allows it (v7x has 2 TensorCores per chip).
    bt = min(_round_up(batch_tile, 128), _round_up(max(B, 1), 128))
    if B > 128 and _round_up(B, bt) // bt < 2:
        bt = _round_up(pl.cdiv(B, 2), 128)
    B_pad = _round_up(B, bt)
    num_tiles = B_pad // bt

    w1p, whp, w6r, bh = pack_params(params)

    xb = x.astype(jnp.bfloat16)
    if B_pad != B:
        xb = jnp.pad(xb, ((0, B_pad - B), (0, 0)))

    in_specs = [
        pl.BlockSpec((bt, input_dim), lambda i: (i, 0)),
        pl.BlockSpec(w1p.shape, lambda i: (0, 0)),
        pl.BlockSpec(whp.shape, lambda i: (0, 0, 0)),
        pl.BlockSpec(w6r.shape, lambda i: (0, 0)),
        pl.BlockSpec(bh.shape, lambda i: (0, 0)),
    ]
    out_specs = pl.BlockSpec((1, bt), lambda i: (0, i))

    # VMEM budget: double-buffered x tile + params + out tile + f32 activation
    # headroom; keep under the scoped limit on every generation (v7x = 64 MiB phys).
    x_tile_b = bt * input_dim * 2
    param_b = (w1p.size + whp.size + w6r.size) * 2 + bh.size * 4
    out_tile_b = bt * 4
    act_b = bt * H * 4 * 4
    vmem_limit = int(2 * x_tile_b + 2 * param_b + 2 * out_tile_b + act_b + (8 << 20))
    vmem_limit = min(vmem_limit, 48 << 20)

    out = pl.pallas_call(
        _mlp_kernel,
        out_shape=jax.ShapeDtypeStruct((1, B_pad), jnp.float32),
        grid_spec=pltpu.PrefetchScalarGridSpec(
            num_scalar_prefetch=0,
            grid=(num_tiles,),
            in_specs=in_specs,
            out_specs=out_specs,
        ),
        compiler_params=pltpu.CompilerParams(
            dimension_semantics=("parallel",),
            vmem_limit_bytes=vmem_limit),
    )(xb, w1p, whp, w6r, bh)

    # x.squeeze(1) in the PyTorch module (and drop batch padding).
    return out[0, :B]


def init_params(input_dim, key):
    """Mirror PyTorch nn.Linear default init: U[-1/sqrt(fan_in), +1/sqrt(fan_in)].
    Weights stored in PyTorch convention (out, in), biases (out,)."""
    params = []
    fan_in = input_dim
    for out_dim in LAYER_DIMS:
        key, kw, kb = jax.random.split(key, 3)
        bound = 1.0 / math.sqrt(fan_in)
        w = jax.random.uniform(kw, (out_dim, fan_in), jnp.float32, -bound, bound)
        b = jax.random.uniform(kb, (out_dim,), jnp.float32, -bound, bound)
        params.append((w, b))
        fan_in = out_dim
    return params


if __name__ == "__main__":
    key = jax.random.PRNGKey(0)
    kx, kp = jax.random.split(key)

    B, input_dim = 16, 32
    x = jax.random.normal(kx, (B, input_dim), jnp.float32)
    params = init_params(input_dim, kp)

    y = my_model2_forward(x, params)
    y = jax.block_until_ready(y)

    # Reference in plain JAX with the same bf16 quantization of x / weights
    # (f32 accumulation), matching the kernel's numerics.
    h = x.astype(jnp.bfloat16).astype(jnp.float32)
    for idx, (w, b) in enumerate(params):
        wq = w.astype(jnp.bfloat16).astype(jnp.float32)
        h = h @ wq.T + b[None, :]
        if idx < len(params) - 1:
            h = jnp.maximum(h, 0.0).astype(jnp.bfloat16).astype(jnp.float32)
    y_ref = h[:, 0]

    assert y.shape == (B,)
    assert jnp.allclose(y, y_ref, atol=2e-3, rtol=2e-3), (
        f"max abs err {jnp.max(jnp.abs(y - y_ref))}")

    print("KERNEL_OK")
</pallas_src>

<mosaic_0001>
module attributes {stable_mosaic.version = 11 : i64} {
  func.func @_mlp_kernel(%arg0: i32, %arg1: memref<128x32xbf16, #tpu.memory_space<vmem>>, %arg2: memref<32x128xbf16, #tpu.memory_space<vmem>>, %arg3: memref<4x128x128xbf16, #tpu.memory_space<vmem>>, %arg4: memref<1x128xbf16, #tpu.memory_space<vmem>>, %arg5: memref<6x128xf32, #tpu.memory_space<vmem>>, %arg6: memref<1x128xf32, #tpu.memory_space<vmem>>) attributes {dimension_semantics = [#tpu.dimension_semantics<parallel>], iteration_bounds = array<i64: 1>, scalar_prefetch = 0 : i64, scratch_operands = 0 : i64, tpu.core_type = #tpu.core_type<tc>, window_params = [{transform_indices = @transform_0, window_bounds = array<i64: 128, 32>}, {pipeline_mode = #tpu.pipeline_mode<synchronous>, transform_indices = @transform_1, window_bounds = array<i64: 32, 128>}, {pipeline_mode = #tpu.pipeline_mode<synchronous>, transform_indices = @transform_2, window_bounds = array<i64: 4, 128, 128>}, {pipeline_mode = #tpu.pipeline_mode<synchronous>, transform_indices = @transform_3, window_bounds = array<i64: 1, 128>}, {pipeline_mode = #tpu.pipeline_mode<synchronous>, transform_indices = @transform_4, window_bounds = array<i64: 6, 128>}, {transform_indices = @transform_5, window_bounds = array<i64: 1, 128>}]} {
    %c0 = arith.constant 0 : index
    %c0_0 = arith.constant 0 : index
    %0 = vector.load %arg1[%c0, %c0_0] : memref<128x32xbf16, #tpu.memory_space<vmem>>, vector<128x32xbf16>
    %c0_1 = arith.constant 0 : index
    %c0_2 = arith.constant 0 : index
    %1 = vector.load %arg2[%c0_1, %c0_2] : memref<32x128xbf16, #tpu.memory_space<vmem>>, vector<32x128xbf16>
    %cst = arith.constant dense<0.000000e+00> : vector<128x128xf32>
    %2 = tpu.matmul %0, %1, %cst {dimension_numbers = #tpu.dot_dimension_numbers<[1], [0], [0], [1], [0, 0, 1, 1], [], []>} : vector<128x32xbf16>, vector<32x128xbf16>, vector<128x128xf32> -> vector<128x128xf32>
    %c0_3 = arith.constant 0 : index
    %c0_4 = arith.constant 0 : index
    %3 = vector.load %arg5[%c0_3, %c0_4] : memref<6x128xf32, #tpu.memory_space<vmem>>, vector<1x128xf32>
    %4 = vector.broadcast %3 : vector<1x128xf32> to vector<128x128xf32>
    %5 = arith.addf %2, %4 : vector<128x128xf32>
    %cst_5 = arith.constant 0.000000e+00 : f32
    %6 = vector.broadcast %cst_5 : f32 to vector<128x128xf32>
    %7 = arith.maximumf %5, %6 : vector<128x128xf32>
    %8 = arith.truncf %7 : vector<128x128xf32> to vector<128x128xbf16>
    %c0_6 = arith.constant 0 : index
    %c0_7 = arith.constant 0 : index
    %c0_8 = arith.constant 0 : index
    %9 = vector.load %arg3[%c0_6, %c0_7, %c0_8] : memref<4x128x128xbf16, #tpu.memory_space<vmem>>, vector<1x128x128xbf16>
    %10 = vector.shape_cast %9 : vector<1x128x128xbf16> to vector<128x128xbf16>
    %cst_9 = arith.constant dense<0.000000e+00> : vector<128x128xf32>
    %11 = tpu.matmul %8, %10, %cst_9 {dimension_numbers = #tpu.dot_dimension_numbers<[1], [0], [0], [1], [0, 0, 1, 1], [], []>} : vector<128x128xbf16>, vector<128x128xbf16>, vector<128x128xf32> -> vector<128x128xf32>
    %c1 = arith.constant 1 : index
    %c0_10 = arith.constant 0 : index
    %12 = vector.load %arg5[%c1, %c0_10] : memref<6x128xf32, #tpu.memory_space<vmem>>, vector<1x128xf32>
    %13 = vector.broadcast %12 : vector<1x128xf32> to vector<128x128xf32>
    %14 = arith.addf %11, %13 : vector<128x128xf32>
    %cst_11 = arith.constant 0.000000e+00 : f32
    %15 = vector.broadcast %cst_11 : f32 to vector<128x128xf32>
    %16 = arith.maximumf %14, %15 : vector<128x128xf32>
    %17 = arith.truncf %16 : vector<128x128xf32> to vector<128x128xbf16>
    %c1_12 = arith.constant 1 : index
    %c0_13 = arith.constant 0 : index
    %c0_14 = arith.constant 0 : index
    %18 = vector.load %arg3[%c1_12, %c0_13, %c0_14] : memref<4x128x128xbf16, #tpu.memory_space<vmem>>, vector<1x128x128xbf16>
    %19 = vector.shape_cast %18 : vector<1x128x128xbf16> to vector<128x128xbf16>
    %cst_15 = arith.constant dense<0.000000e+00> : vector<128x128xf32>
    %20 = tpu.matmul %17, %19, %cst_15 {dimension_numbers = #tpu.dot_dimension_numbers<[1], [0], [0], [1], [0, 0, 1, 1], [], []>} : vector<128x128xbf16>, vector<128x128xbf16>, vector<128x128xf32> -> vector<128x128xf32>
    %c2 = arith.constant 2 : index
    %c0_16 = arith.constant 0 : index
    %21 = vector.load %arg5[%c2, %c0_16] : memref<6x128xf32, #tpu.memory_space<vmem>>, vector<1x128xf32>
    %22 = vector.broadcast %21 : vector<1x128xf32> to vector<128x128xf32>
    %23 = arith.addf %20, %22 : vector<128x128xf32>
    %cst_17 = arith.constant 0.000000e+00 : f32
    %24 = vector.broadcast %cst_17 : f32 to vector<128x128xf32>
    %25 = arith.maximumf %23, %24 : vector<128x128xf32>
    %26 = arith.truncf %25 : vector<128x128xf32> to vector<128x128xbf16>
    %c2_18 = arith.constant 2 : index
    %c0_19 = arith.constant 0 : index
    %c0_20 = arith.constant 0 : index
    %27 = vector.load %arg3[%c2_18, %c0_19, %c0_20] : memref<4x128x128xbf16, #tpu.memory_space<vmem>>, vector<1x128x128xbf16>
    %28 = vector.shape_cast %27 : vector<1x128x128xbf16> to vector<128x128xbf16>
    %cst_21 = arith.constant dense<0.000000e+00> : vector<128x128xf32>
    %29 = tpu.matmul %26, %28, %cst_21 {dimension_numbers = #tpu.dot_dimension_numbers<[1], [0], [0], [1], [0, 0, 1, 1], [], []>} : vector<128x128xbf16>, vector<128x128xbf16>, vector<128x128xf32> -> vector<128x128xf32>
    %c3 = arith.constant 3 : index
    %c0_22 = arith.constant 0 : index
    %30 = vector.load %arg5[%c3, %c0_22] : memref<6x128xf32, #tpu.memory_space<vmem>>, vector<1x128xf32>
    %31 = vector.broadcast %30 : vector<1x128xf32> to vector<128x128xf32>
    %32 = arith.addf %29, %31 : vector<128x128xf32>
    %cst_23 = arith.constant 0.000000e+00 : f32
    %33 = vector.broadcast %cst_23 : f32 to vector<128x128xf32>
    %34 = arith.maximumf %32, %33 : vector<128x128xf32>
    %35 = arith.truncf %34 : vector<128x128xf32> to vector<128x128xbf16>
    %c3_24 = arith.constant 3 : index
    %c0_25 = arith.constant 0 : index
    %c0_26 = arith.constant 0 : index
    %36 = vector.load %arg3[%c3_24, %c0_25, %c0_26] : memref<4x128x128xbf16, #tpu.memory_space<vmem>>, vector<1x128x128xbf16>
    %37 = vector.shape_cast %36 : vector<1x128x128xbf16> to vector<128x128xbf16>
    %cst_27 = arith.constant dense<0.000000e+00> : vector<128x128xf32>
    %38 = tpu.matmul %35, %37, %cst_27 {dimension_numbers = #tpu.dot_dimension_numbers<[1], [0], [0], [1], [0, 0, 1, 1], [], []>} : vector<128x128xbf16>, vector<128x128xbf16>, vector<128x128xf32> -> vector<128x128xf32>
    %c4 = arith.constant 4 : index
    %c0_28 = arith.constant 0 : index
    %39 = vector.load %arg5[%c4, %c0_28] : memref<6x128xf32, #tpu.memory_space<vmem>>, vector<1x128xf32>
    %40 = vector.broadcast %39 : vector<1x128xf32> to vector<128x128xf32>
    %41 = arith.addf %38, %40 : vector<128x128xf32>
    %cst_29 = arith.constant 0.000000e+00 : f32
    %42 = vector.broadcast %cst_29 : f32 to vector<128x128xf32>
    %43 = arith.maximumf %41, %42 : vector<128x128xf32>
    %44 = arith.truncf %43 : vector<128x128xf32> to vector<128x128xbf16>
    %c0_30 = arith.constant 0 : index
    %c0_31 = arith.constant 0 : index
    %45 = vector.load %arg4[%c0_30, %c0_31] : memref<1x128xbf16, #tpu.memory_space<vmem>>, vector<1x128xbf16>
    %cst_32 = arith.constant dense<0.000000e+00> : vector<1x128xf32>
    %46 = tpu.matmul %45, %44, %cst_32 {dimension_numbers = #tpu.dot_dimension_numbers<[1], [1], [0], [0], [0, 0, 1, 0], [], []>} : vector<1x128xbf16>, vector<128x128xbf16>, vector<1x128xf32> -> vector<1x128xf32>
    %c5 = arith.constant 5 : index
    %c0_33 = arith.constant 0 : index
    %47 = vector.load %arg5[%c5, %c0_33] : memref<6x128xf32, #tpu.memory_space<vmem>>, vector<1x1xf32>
    %48 = vector.broadcast %47 : vector<1x1xf32> to vector<1x128xf32>
    %49 = arith.addf %46, %48 : vector<1x128xf32>
    %c0_34 = arith.constant 0 : index
    %c0_35 = arith.constant 0 : index
    %50 = vector.load %arg6[%c0_34, %c0_35] : memref<1x128xf32, #tpu.memory_space<vmem>>, vector<1x128xf32>
    tpu.vector_store %arg6[%c0_34, %c0_35], %49 {strides = array<i32>} : memref<1x128xf32, #tpu.memory_space<vmem>>, vector<1x128xf32>,
    return
  }
  func.func @transform_0(%arg0: i32) -> (i32, i32) {
    %c0_i32 = arith.constant 0 : i32
    %c0_i32_0 = arith.constant 0 : i32
    return %arg0, %c0_i32 : i32, i32
  }
  func.func @transform_1(%arg0: i32) -> (i32, i32) {
    %c0_i32 = arith.constant 0 : i32
    %c0_i32_0 = arith.constant 0 : i32
    %c0_i32_1 = arith.constant 0 : i32
    return %c0_i32, %c0_i32_0 : i32, i32
  }
  func.func @transform_2(%arg0: i32) -> (i32, i32, i32) {
    %c0_i32 = arith.constant 0 : i32
    %c0_i32_0 = arith.constant 0 : i32
    %c0_i32_1 = arith.constant 0 : i32
    %c0_i32_2 = arith.constant 0 : i32
    return %c0_i32, %c0_i32_0, %c0_i32_1 : i32, i32, i32
  }
  func.func @transform_3(%arg0: i32) -> (i32, i32) {
    %c0_i32 = arith.constant 0 : i32
    %c0_i32_0 = arith.constant 0 : i32
    %c0_i32_1 = arith.constant 0 : i32
    return %c0_i32, %c0_i32_0 : i32, i32
  }
  func.func @transform_4(%arg0: i32) -> (i32, i32) {
    %c0_i32 = arith.constant 0 : i32
    %c0_i32_0 = arith.constant 0 : i32
    %c0_i32_1 = arith.constant 0 : i32
    return %c0_i32, %c0_i32_0 : i32, i32
  }
  func.func @transform_5(%arg0: i32) -> (i32, i32) {
    %c0_i32 = arith.constant 0 : i32
    %c0_i32_0 = arith.constant 0 : i32
    return %c0_i32, %arg0 : i32, i32
  }
}

</mosaic_0001>

<llo_original>
// kernel: tpu_custom_call.1
$region0: #{tpu_custom_call.1}
  #allocation0 [shape = 'u32[]', space=smem, size = 0x4, offset = 0x4, fixed_abs, tag = 'smem constant byte address 0x4 - core index']
  #allocation1 [shape = 'u32[144,128]{1,0:T(1,128)}', space=vmem, size = 0x12000, scoped, tag = 'internal scratch']
  %s0 = inlined_call_operand.vmem [shape: bf16[128,32], index: 0, kind: input, shape index: {}]
  %s1 = inlined_call_operand.vmem [shape: bf16[32,128], index: 1, kind: input, shape index: {}]
  %s2 = inlined_call_operand.hbm [shape: bf16[4,128,128], index: 2, kind: input, shape index: {}]
  %s3 = inlined_call_operand.vmem [shape: bf16[1,128], index: 3, kind: input, shape index: {}]
  %s4 = inlined_call_operand.vmem [shape: f32[6,128], index: 4, kind: input, shape index: {}]
  %s5 = inlined_call_operand.hbm [shape: f32[1,128], index: 5, kind: output, shape index: {}]
  %s6 = sld [smem:[#allocation0]]
  $region34: #{tpu_custom_call.1} parent=0
    _
  %s8 = ssub.s32 1, %s6
  %s9 = scalar_select 0, %s8, %s6
  $region1: #{tpu_custom_call.1} parent=0
    #allocation2 [shape = 'u8[131072]{0}', space=vmem, size = 0x20000, scoped, tag = 'input window, operand 2, single buffered']
    #allocation3 [shape = 's32[1]{0}', space=sflag, size = 0x4, scoped, tag = 'scoped memory for tpu_custom_call.1']
    #allocation4 [shape = 's32[1]{0}', space=sflag, size = 0x4, scoped, tag = 'scoped memory for tpu_custom_call.1']
    #allocation5 [shape = 'u8[512]{0}', space=vmem, size = 0x400, scoped, tag = 'output window, operand 0, single buffered']
    %10 = vsyncpa [#allocation3], 0
    %11 = vsyncpa [#allocation4], 0
    // Predicated region
    $region2: #{tpu_custom_call.1} parent=1 // pred_check
      _
    $region3: #{tpu_custom_call.1} parent=1 // pred_check_branch
      %13 = sbr.rel (0) target = $region5
    $region4: #{tpu_custom_call.1} parent=1 // pred_region
      _
    $region5: #{tpu_custom_call.1} parent=1 // pred_fallthru
      _
    // Predicated region
    $region6: #{tpu_custom_call.1} parent=1 // pred_check
      _
    $region7: #{tpu_custom_call.1} parent=1 // pred_check_branch
      %15 = sbr.rel (0) target = $region9
    $region8: #{tpu_custom_call.1} parent=1 // pred_region
      _
    $region9: #{tpu_custom_call.1} parent=1 // pred_fallthru
      _
    // Predicated region
    $region10: #{tpu_custom_call.1} parent=1 // pred_check
      _
    $region11: #{tpu_custom_call.1} parent=1 // pred_check_branch
      %17 = sbr.rel (0) target = $region13
    $region12: #{tpu_custom_call.1} parent=1 // pred_region
      %s19 = ssub.s32 4096, 4096
      %20 = vsyncadd [#allocation3], %s19
      %s21 = sshll.u32 [#allocation2], 4
      %s22 = int_to_ptr.vmem [resolvable:$true] %s21
      %27 = dma.hbm_to_vmem [thread:$0]  %s2, 4096, %s22, [#allocation3], 64, 64, 4
    $region13: #{tpu_custom_call.1} parent=1 // pred_fallthru
      _
    // Predicated region
    $region14: #{tpu_custom_call.1} parent=1 // pred_check
      _
    $region15: #{tpu_custom_call.1} parent=1 // pred_check_branch
      %29 = sbr.rel (0) target = $region17
    $region16: #{tpu_custom_call.1} parent=1 // pred_region
      _
    $region17: #{tpu_custom_call.1} parent=1 // pred_fallthru
      _
    // Predicated region
    $region18: #{tpu_custom_call.1} parent=1 // pred_check
      _
    $region19: #{tpu_custom_call.1} parent=1 // pred_check_branch
      %31 = sbr.rel (0) target = $region21
    $region20: #{tpu_custom_call.1} parent=1 // pred_region
      _
    $region21: #{tpu_custom_call.1} parent=1 // pred_fallthru
      _
    // Predicated region
    $region22: #{tpu_custom_call.1} parent=1 // pred_check
      _
    $region23: #{tpu_custom_call.1} parent=1 // pred_check_branch
      %33 = sbr.rel (0) target = $region25
    $region24: #{tpu_custom_call.1} parent=1 // pred_region
      %34 = dma.done [#allocation3], 4096
    $region25: #{tpu_custom_call.1} parent=1 // pred_fallthru
      _
    %v36 = vld [vmem:[%s0] sm:$0xf]
    %v37 = vld [vmem:[%s0 + $0x4] sm:$0xf]
    %v38 = vld [vmem:[%s0 + $0x8] sm:$0xf]
    %v39 = vld [vmem:[%s0 + $0xc] sm:$0xf]
    %v40 = vld [vmem:[%s0 + $0x10] sm:$0xf]
    %v41 = vld [vmem:[%s0 + $0x14] sm:$0xf]
    %v42 = vld [vmem:[%s0 + $0x18] sm:$0xf]
    %v43 = vld [vmem:[%s0 + $0x1c] sm:$0xf]
    %v44 = vld [vmem:[%s0 + $0x20] sm:$0xf]
    %v45 = vld [vmem:[%s0 + $0x24] sm:$0xf]
    %v46 = vld [vmem:[%s0 + $0x28] sm:$0xf]
    %v47 = vld [vmem:[%s0 + $0x2c] sm:$0xf]
    %v48 = vld [vmem:[%s0 + $0x30] sm:$0xf]
    %v49 = vld [vmem:[%s0 + $0x34] sm:$0xf]
    %v50 = vld [vmem:[%s0 + $0x38] sm:$0xf]
    %v51 = vld [vmem:[%s0 + $0x3c] sm:$0xf]
    %v52 = vld [vmem:[%s1] sm:$0xf]
    %v53 = vld [vmem:[%s1 + $0x4] sm:$0xf]
    %v54 = vld [vmem:[%s1 + $0x8] sm:$0xf]
    %v55 = vld [vmem:[%s1 + $0xc] sm:$0xf]
    %v56 = vld [vmem:[%s4] sm:$0x1]
    %v57 = vlaneseq
    %v58 = vshrl.u32 %v57, 7
    %v59 = vsub.s32 0, %v58
    %v60 = vrot.slane %v56, %v59
    %v77 = vunpack.c.l.b16 %v36
    %v78 = vunpack.c.l.b16 %v37
    %v79 = vunpack.c.l.b16 %v38
    %v80 = vunpack.c.l.b16 %v39
    %v81 = vunpack.c.l.b16 %v40
    %v82 = vunpack.c.l.b16 %v41
    %v83 = vunpack.c.l.b16 %v42
    %v84 = vunpack.c.l.b16 %v43
    %v85 = vunpack.c.l.b16 %v44
    %v86 = vunpack.c.l.b16 %v45
    %v87 = vunpack.c.l.b16 %v46
    %v88 = vunpack.c.l.b16 %v47
    %v89 = vunpack.c.l.b16 %v48
    %v90 = vunpack.c.l.b16 %v49
    %v91 = vunpack.c.l.b16 %v50
    %v92 = vunpack.c.l.b16 %v51
    %v93 = vpack.c.b16 %v78, %v77
    %v94 = vpack.c.b16 %v80, %v79
    %v95 = vpack.c.b16 %v82, %v81
    %v96 = vpack.c.b16 %v84, %v83
    %v97 = vpack.c.b16 %v86, %v85
    %v98 = vpack.c.b16 %v88, %v87
    %v99 = vpack.c.b16 %v90, %v89
    %v100 = vpack.c.b16 %v92, %v91
    %v105 = vunpack.c.l.b16 %v52
    %v106 = vunpack.c.l.b16 %v53
    %v107 = vunpack.c.l.b16 %v54
    %v108 = vunpack.c.l.b16 %v55
    %v109 = vpack.c.b16 %v106, %v105
    %v110 = vpack.c.b16 %v108, %v107
    %vm113 = vcmask 261120
    %v115 = vsel %vm113, %v93, 0
    %v118 = vsel %vm113, %v94, 0
    %v121 = vsel %vm113, %v95, 0
    %v124 = vsel %vm113, %v96, 0
    %v127 = vsel %vm113, %v97, 0
    %v130 = vsel %vm113, %v98, 0
    %v133 = vsel %vm113, %v99, 0
    %v136 = vsel %vm113, %v100, 0
    %138 = vmatprep.subr.bf16.mxu0 0
    %139 = vmatpush1.bf16.msra.mxu0 0
    %140 = vmatprep.subr.bf16.mxu0 0
    %141 = vmatpush1.bf16.msra.mxu0 0
    %142 = vmatprep.subr.bf16.mxu0 0
    %143 = vmatpush1.bf16.msra.mxu0 0
    %144 = vmatprep.subr.bf16.mxu0 0
    %145 = vmatpush1.bf16.msra.mxu0 0
    %146 = vmatprep.subr.bf16.mxu0 0
    %147 = vmatpush1.bf16.msra.mxu0 0
    %148 = vmatprep.subr.bf16.mxu0 0
    %149 = vmatpush1.bf16.msra.mxu0 0
    %150 = vmatprep.subr.bf16.mxu0 0
    %151 = vmatpush1.bf16.msra.mxu0 %v110
    %152 = vmatprep.subr.bf16.mxu0 0
    %153 = vmatpush1.bf16.msra.mxu0 %v109
    %154 = vmatprep.subr.bf16.mxu0 0
    %155 = vmatpush2.bf16.msra.mxu0 0
    %156 = vmatprep.subr.bf16.mxu0 0
    %157 = vmatpush2.bf16.msra.mxu0 0
    %158 = vmatprep.subr.bf16.mxu0 0
    %159 = vmatpush2.bf16.msra.mxu0 0
    %160 = vmatprep.subr.bf16.mxu0 0
    %161 = vmatpush2.bf16.msra.mxu0 0
    %162 = vmatprep.subr.bf16.mxu0 0
    %163 = vmatpush2.bf16.msra.mxu0 0
    %164 = vmatprep.subr.bf16.mxu0 0
    %165 = vmatpush2.bf16.msra.mxu0 0
    %166 = vmatprep.subr.bf16.mxu0 0
    %167 = vmatpush2.bf16.msra.mxu0 0
    %168 = vmatprep.subr.bf16.mxu0 0
    %169 = vmatpush2.bf16.msra.mxu0 0
    %170 = vmatprep.mubr.bf16.mxu0 0
    %171 = vmatmul.mubr.bf16.gmra.mxu0 %v115
    %v172 = vpop.f32.mrf.mxu0
    %v173 = vadd.f32 %v60, %v172
    %v174 = vpop.f32.mrf.mxu0
    %v175 = vpop.f32.mrf.mxu0
    %v176 = vadd.f32 %v60, %v175
    %v177 = vpop.f32.mrf.mxu0
    %178 = vmatprep.mubr.bf16.mxu0 0
    %179 = vmatmul.mubr.bf16.gmra.mxu0 %v118
    %v180 = vpop.f32.mrf.mxu0
    %v181 = vadd.f32 %v60, %v180
    %v182 = vpop.f32.mrf.mxu0
    %v183 = vpop.f32.mrf.mxu0
    %v184 = vadd.f32 %v60, %v183
    %v185 = vpop.f32.mrf.mxu0
    %186 = vmatprep.mubr.bf16.mxu0 0
    %187 = vmatmul.mubr.bf16.gmra.mxu0 %v121
    %v188 = vpop.f32.mrf.mxu0
    %v189 = vadd.f32 %v60, %v188
    %v190 = vpop.f32.mrf.mxu0
    %v191 = vpop.f32.mrf.mxu0
    %v192 = vadd.f32 %v60, %v191
    %v193 = vpop.f32.mrf.mxu0
    %194 = vmatprep.mubr.bf16.mxu0 0
    %195 = vmatmul.mubr.bf16.gmra.mxu0 %v124
    %v196 = vpop.f32.mrf.mxu0
    %v197 = vadd.f32 %v60, %v196
    %v198 = vpop.f32.mrf.mxu0
    %v199 = vpop.f32.mrf.mxu0
    %v200 = vadd.f32 %v60, %v199
    %v201 = vpop.f32.mrf.mxu0
    %202 = vmatprep.mubr.bf16.mxu0 0
    %203 = vmatmul.mubr.bf16.gmra.mxu0 %v127
    %v204 = vpop.f32.mrf.mxu0
    %v205 = vadd.f32 %v60, %v204
    %v206 = vpop.f32.mrf.mxu0
    %v207 = vpop.f32.mrf.mxu0
    %v208 = vadd.f32 %v60, %v207
    %v209 = vpop.f32.mrf.mxu0
    %210 = vmatprep.mubr.bf16.mxu0 0
    %211 = vmatmul.mubr.bf16.gmra.mxu0 %v130
    %v212 = vpop.f32.mrf.mxu0
    %v213 = vadd.f32 %v60, %v212
    %v214 = vpop.f32.mrf.mxu0
    %v215 = vpop.f32.mrf.mxu0
    %v216 = vadd.f32 %v60, %v215
    %v217 = vpop.f32.mrf.mxu0
    %218 = vmatprep.mubr.bf16.mxu0 0
    %219 = vmatmul.mubr.bf16.gmra.mxu0 %v133
    %v220 = vpop.f32.mrf.mxu0
    %v221 = vadd.f32 %v60, %v220
    %v222 = vpop.f32.mrf.mxu0
    %v223 = vpop.f32.mrf.mxu0
    %v224 = vadd.f32 %v60, %v223
    %v225 = vpop.f32.mrf.mxu0
    %226 = vmatprep.mubr.bf16.mxu0 0
    %227 = vmatmul.mubr.bf16.gmra.mxu0 %v136
    %v228 = vpop.f32.mrf.mxu0
    %v229 = vadd.f32 %v60, %v228
    %v230 = vpop.f32.mrf.mxu0
    %v231 = vpop.f32.mrf.mxu0
    %v232 = vadd.f32 %v60, %v231
    %v233 = vpop.f32.mrf.mxu0
    %234 = vdwg.mxu0
    %v235 = vmax.f32 %v173, 0.0
    %v236 = vmax.f32 %v176, 0.0
    %v237 = vmax.f32 %v181, 0.0
    %v238 = vmax.f32 %v184, 0.0
    %v239 = vmax.f32 %v189, 0.0
    %v240 = vmax.f32 %v192, 0.0
    %v241 = vmax.f32 %v197, 0.0
    %v242 = vmax.f32 %v200, 0.0
    %v243 = vmax.f32 %v205, 0.0
    %v244 = vmax.f32 %v208, 0.0
    %v245 = vmax.f32 %v213, 0.0
    %v246 = vmax.f32 %v216, 0.0
    %v247 = vmax.f32 %v221, 0.0
    %v248 = vmax.f32 %v224, 0.0
    %v249 = vmax.f32 %v229, 0.0
    %v250 = vmax.f32 %v232, 0.0
    %v251 = vpack.c.bf16 %v236, %v235
    %v252 = vpack.c.bf16 %v238, %v237
    %v253 = vpack.c.bf16 %v240, %v239
    %v254 = vpack.c.bf16 %v242, %v241
    %v255 = vpack.c.bf16 %v244, %v243
    %v256 = vpack.c.bf16 %v246, %v245
    %v257 = vpack.c.bf16 %v248, %v247
    %v258 = vpack.c.bf16 %v250, %v249
    %v259 = vld [vmem:[#allocation2] sm:$0xf]
    %v260 = vld [vmem:[#allocation2 + $0x4] sm:$0xf]
    %v261 = vld [vmem:[#allocation2 + $0x8] sm:$0xf]
    %v262 = vld [vmem:[#allocation2 + $0xc] sm:$0xf]
    %v263 = vld [vmem:[#allocation2 + $0x10] sm:$0xf]
    %v264 = vld [vmem:[#allocation2 + $0x14] sm:$0xf]
    %v265 = vld [vmem:[#allocation2 + $0x18] sm:$0xf]
    %v266 = vld [vmem:[#allocation2 + $0x1c] sm:$0xf]
    %v267 = vld [vmem:[#allocation2 + $0x20] sm:$0xf]
    %v268 = vld [vmem:[#allocation2 + $0x24] sm:$0xf]
    %v269 = vld [vmem:[#allocation2 + $0x28] sm:$0xf]
    %v270 = vld [vmem:[#allocation2 + $0x2c] sm:$0xf]
    %v271 = vld [vmem:[#allocation2 + $0x30] sm:$0xf]
    %v272 = vld [vmem:[#allocation2 + $0x34] sm:$0xf]
    %v273 = vld [vmem:[#allocation2 + $0x38] sm:$0xf]
    %v274 = vld [vmem:[#allocation2 + $0x3c] sm:$0xf]
    %v275 = vld [vmem:[%s4 + $0x1] sm:$0x1]
    %v276 = vlaneseq
    %v277 = vshrl.u32 %v276, 7
    %v278 = vsub.s32 0, %v277
    %v279 = vrot.slane %v275, %v278
    %v296 = vunpack.c.l.b16 %v259
    %v297 = vunpack.c.l.b16 %v260
    %v298 = vunpack.c.l.b16 %v261
    %v299 = vunpack.c.l.b16 %v262
    %v300 = vunpack.c.l.b16 %v263
    %v301 = vunpack.c.l.b16 %v264
    %v302 = vunpack.c.l.b16 %v265
    %v303 = vunpack.c.l.b16 %v266
    %v304 = vunpack.c.l.b16 %v267
    %v305 = vunpack.c.l.b16 %v268
    %v306 = vunpack.c.l.b16 %v269
    %v307 = vunpack.c.l.b16 %v270
    %v308 = vunpack.c.l.b16 %v271
    %v309 = vunpack.c.l.b16 %v272
    %v310 = vunpack.c.l.b16 %v273
    %v311 = vunpack.c.l.b16 %v274
    %v312 = vpack.c.b16 %v297, %v296
    %v313 = vpack.c.b16 %v299, %v298
    %v314 = vpack.c.b16 %v301, %v300
    %v315 = vpack.c.b16 %v303, %v302
    %v316 = vpack.c.b16 %v305, %v304
    %v317 = vpack.c.b16 %v307, %v306
    %v318 = vpack.c.b16 %v309, %v308
    %v319 = vpack.c.b16 %v311, %v310
    %328 = vmatprep.subr.bf16.mxu0 0
    %329 = vmatpush1.bf16.msra.mxu0 %v319
    %330 = vmatprep.subr.bf16.mxu0 0
    %331 = vmatpush1.bf16.msra.mxu0 %v318
    %332 = vmatprep.subr.bf16.mxu0 0
    %333 = vmatpush1.bf16.msra.mxu0 %v317
    %334 = vmatprep.subr.bf16.mxu0 0
    %335 = vmatpush1.bf16.msra.mxu0 %v316
    %336 = vmatprep.subr.bf16.mxu0 0
    %337 = vmatpush1.bf16.msra.mxu0 %v315
    %338 = vmatprep.subr.bf16.mxu0 0
    %339 = vmatpush1.bf16.msra.mxu0 %v314
    %340 = vmatprep.subr.bf16.mxu0 0
    %341 = vmatpush1.bf16.msra.mxu0 %v313
    %342 = vmatprep.subr.bf16.mxu0 0
    %343 = vmatpush1.bf16.msra.mxu0 %v312
    %344 = vmatprep.subr.bf16.mxu0 0
    %345 = vmatpush2.bf16.msra.mxu0 0
    %346 = vmatprep.subr.bf16.mxu0 0
    %347 = vmatpush2.bf16.msra.mxu0 0
    %348 = vmatprep.subr.bf16.mxu0 0
    %349 = vmatpush2.bf16.msra.mxu0 0
    %350 = vmatprep.subr.bf16.mxu0 0
    %351 = vmatpush2.bf16.msra.mxu0 0
    %352 = vmatprep.subr.bf16.mxu0 0
    %353 = vmatpush2.bf16.msra.mxu0 0
    %354 = vmatprep.subr.bf16.mxu0 0
    %355 = vmatpush2.bf16.msra.mxu0 0
    %356 = vmatprep.subr.bf16.mxu0 0
    %357 = vmatpush2.bf16.msra.mxu0 0
    %358 = vmatprep.subr.bf16.mxu0 0
    %359 = vmatpush2.bf16.msra.mxu0 0
    %360 = vmatprep.mubr.bf16.mxu0 0
    %361 = vmatmul.mubr.bf16.gmra.mxu0 %v251
    %v362 = vpop.f32.mrf.mxu0
    %v363 = vadd.f32 %v279, %v362
    %v364 = vpop.f32.mrf.mxu0
    %v365 = vpop.f32.mrf.mxu0
    %v366 = vadd.f32 %v279, %v365
    %v367 = vpop.f32.mrf.mxu0
    %368 = vmatprep.mubr.bf16.mxu0 0
    %369 = vmatmul.mubr.bf16.gmra.mxu0 %v252
    %v370 = vpop.f32.mrf.mxu0
    %v371 = vadd.f32 %v279, %v370
    %v372 = vpop.f32.mrf.mxu0
    %v373 = vpop.f32.mrf.mxu0
    %v374 = vadd.f32 %v279, %v373
    %v375 = vpop.f32.mrf.mxu0
    %376 = vmatprep.mubr.bf16.mxu0 0
    %377 = vmatmul.mubr.bf16.gmra.mxu0 %v253
    %v378 = vpop.f32.mrf.mxu0
    %v379 = vadd.f32 %v279, %v378
    %v380 = vpop.f32.mrf.mxu0
    %v381 = vpop.f32.mrf.mxu0
    %v382 = vadd.f32 %v279, %v381
    %v383 = vpop.f32.mrf.mxu0
    %384 = vmatprep.mubr.bf16.mxu0 0
    %385 = vmatmul.mubr.bf16.gmra.mxu0 %v254
    %v386 = vpop.f32.mrf.mxu0
    %v387 = vadd.f32 %v279, %v386
    %v388 = vpop.f32.mrf.mxu0
    %v389 = vpop.f32.mrf.mxu0
    %v390 = vadd.f32 %v279, %v389
    %v391 = vpop.f32.mrf.mxu0
    %392 = vmatprep.mubr.bf16.mxu0 0
    %393 = vmatmul.mubr.bf16.gmra.mxu0 %v255
    %v394 = vpop.f32.mrf.mxu0
    %v395 = vadd.f32 %v279, %v394
    %v396 = vpop.f32.mrf.mxu0
    %v397 = vpop.f32.mrf.mxu0
    %v398 = vadd.f32 %v279, %v397
    %v399 = vpop.f32.mrf.mxu0
    %400 = vmatprep.mubr.bf16.mxu0 0
    %401 = vmatmul.mubr.bf16.gmra.mxu0 %v256
    %v402 = vpop.f32.mrf.mxu0
    %v403 = vadd.f32 %v279, %v402
    %v404 = vpop.f32.mrf.mxu0
    %v405 = vpop.f32.mrf.mxu0
    %v406 = vadd.f32 %v279, %v405
    %v407 = vpop.f32.mrf.mxu0
    %408 = vmatprep.mubr.bf16.mxu0 0
    %409 = vmatmul.mubr.bf16.gmra.mxu0 %v257
    %v410 = vpop.f32.mrf.mxu0
    %v411 = vadd.f32 %v279, %v410
    %v412 = vpop.f32.mrf.mxu0
    %v413 = vpop.f32.mrf.mxu0
    %v414 = vadd.f32 %v279, %v413
    %v415 = vpop.f32.mrf.mxu0
    %416 = vmatprep.mubr.bf16.mxu0 0
    %417 = vmatmul.mubr.bf16.gmra.mxu0 %v258
    %v418 = vpop.f32.mrf.mxu0
    %v419 = vadd.f32 %v279, %v418
    %v420 = vpop.f32.mrf.mxu0
    %v421 = vpop.f32.mrf.mxu0
    %v422 = vadd.f32 %v279, %v421
    %v423 = vpop.f32.mrf.mxu0
    %424 = vdwg.mxu0
    %v425 = vmax.f32 %v363, 0.0
    %v426 = vmax.f32 %v366, 0.0
    %v427 = vmax.f32 %v371, 0.0
    %v428 = vmax.f32 %v374, 0.0
    %v429 = vmax.f32 %v379, 0.0
    %v430 = vmax.f32 %v382, 0.0
    %v431 = vmax.f32 %v387, 0.0
    %v432 = vmax.f32 %v390, 0.0
    %v433 = vmax.f32 %v395, 0.0
    %v434 = vmax.f32 %v398, 0.0
    %v435 = vmax.f32 %v403, 0.0
    %v436 = vmax.f32 %v406, 0.0
    %v437 = vmax.f32 %v411, 0.0
    %v438 = vmax.f32 %v414, 0.0
    %v439 = vmax.f32 %v419, 0.0
    %v440 = vmax.f32 %v422, 0.0
    %v441 = vpack.c.bf16 %v426, %v425
    %v442 = vpack.c.bf16 %v428, %v427
    %v443 = vpack.c.bf16 %v430, %v429
    %v444 = vpack.c.bf16 %v432, %v431
    %v445 = vpack.c.bf16 %v434, %v433
    %v446 = vpack.c.bf16 %v436, %v435
    %v447 = vpack.c.bf16 %v438, %v437
    %v448 = vpack.c.bf16 %v440, %v439
    %s449 = scalar_lea.vmem [#allocation2], 64
    %v450 = vld [vmem:[%s449] sm:$0xf]
    %v451 = vld [vmem:[%s449 + $0x4] sm:$0xf]
    %v452 = vld [vmem:[%s449 + $0x8] sm:$0xf]
    %v453 = vld [vmem:[%s449 + $0xc] sm:$0xf]
    %v454 = vld [vmem:[%s449 + $0x10] sm:$0xf]
    %v455 = vld [vmem:[%s449 + $0x14] sm:$0xf]
    %v456 = vld [vmem:[%s449 + $0x18] sm:$0xf]
    %v457 = vld [vmem:[%s449 + $0x1c] sm:$0xf]
    %v458 = vld [vmem:[%s449 + $0x20] sm:$0xf]
    %v459 = vld [vmem:[%s449 + $0x24] sm:$0xf]
    %v460 = vld [vmem:[%s449 + $0x28] sm:$0xf]
    %v461 = vld [vmem:[%s449 + $0x2c] sm:$0xf]
    %v462 = vld [vmem:[%s449 + $0x30] sm:$0xf]
    %v463 = vld [vmem:[%s449 + $0x34] sm:$0xf]
    %v464 = vld [vmem:[%s449 + $0x38] sm:$0xf]
    %v465 = vld [vmem:[%s449 + $0x3c] sm:$0xf]
    %v466 = vld [vmem:[%s4 + $0x2] sm:$0x1]
    %v467 = vlaneseq
    %v468 = vshrl.u32 %v467, 7
    %v469 = vsub.s32 0, %v468
    %v470 = vrot.slane %v466, %v469
    %v487 = vunpack.c.l.b16 %v450
    %v488 = vunpack.c.l.b16 %v451
    %v489 = vunpack.c.l.b16 %v452
    %v490 = vunpack.c.l.b16 %v453
    %v491 = vunpack.c.l.b16 %v454
    %v492 = vunpack.c.l.b16 %v455
    %v493 = vunpack.c.l.b16 %v456
    %v494 = vunpack.c.l.b16 %v457
    %v495 = vunpack.c.l.b16 %v458
    %v496 = vunpack.c.l.b16 %v459
    %v497 = vunpack.c.l.b16 %v460
    %v498 = vunpack.c.l.b16 %v461
    %v499 = vunpack.c.l.b16 %v462
    %v500 = vunpack.c.l.b16 %v463
    %v501 = vunpack.c.l.b16 %v464
    %v502 = vunpack.c.l.b16 %v465
    %v503 = vpack.c.b16 %v488, %v487
    %v504 = vpack.c.b16 %v490, %v489
    %v505 = vpack.c.b16 %v492, %v491
    %v506 = vpack.c.b16 %v494, %v493
    %v507 = vpack.c.b16 %v496, %v495
    %v508 = vpack.c.b16 %v498, %v497
    %v509 = vpack.c.b16 %v500, %v499
    %v510 = vpack.c.b16 %v502, %v501
    %519 = vmatprep.subr.bf16.mxu0 0
    %520 = vmatpush1.bf16.msra.mxu0 %v510
    %521 = vmatprep.subr.bf16.mxu0 0
    %522 = vmatpush1.bf16.msra.mxu0 %v509
    %523 = vmatprep.subr.bf16.mxu0 0
    %524 = vmatpush1.bf16.msra.mxu0 %v508
    %525 = vmatprep.subr.bf16.mxu0 0
    %526 = vmatpush1.bf16.msra.mxu0 %v507
    %527 = vmatprep.subr.bf16.mxu0 0
    %528 = vmatpush1.bf16.msra.mxu0 %v506
    %529 = vmatprep.subr.bf16.mxu0 0
    %530 = vmatpush1.bf16.msra.mxu0 %v505
    %531 = vmatprep.subr.bf16.mxu0 0
    %532 = vmatpush1.bf16.msra.mxu0 %v504
    %533 = vmatprep.subr.bf16.mxu0 0
    %534 = vmatpush1.bf16.msra.mxu0 %v503
    %535 = vmatprep.subr.bf16.mxu0 0
    %536 = vmatpush2.bf16.msra.mxu0 0
    %537 = vmatprep.subr.bf16.mxu0 0
    %538 = vmatpush2.bf16.msra.mxu0 0
    %539 = vmatprep.subr.bf16.mxu0 0
    %540 = vmatpush2.bf16.msra.mxu0 0
    %541 = vmatprep.subr.bf16.mxu0 0
    %542 = vmatpush2.bf16.msra.mxu0 0
    %543 = vmatprep.subr.bf16.mxu0 0
    %544 = vmatpush2.bf16.msra.mxu0 0
    %545 = vmatprep.subr.bf16.mxu0 0
    %546 = vmatpush2.bf16.msra.mxu0 0
    %547 = vmatprep.subr.bf16.mxu0 0
    %548 = vmatpush2.bf16.msra.mxu0 0
    %549 = vmatprep.subr.bf16.mxu0 0
    %550 = vmatpush2.bf16.msra.mxu0 0
    %551 = vmatprep.mubr.bf16.mxu0 0
    %552 = vmatmul.mubr.bf16.gmra.mxu0 %v441
    %v553 = vpop.f32.mrf.mxu0
    %v554 = vadd.f32 %v470, %v553
    %v555 = vpop.f32.mrf.mxu0
    %v556 = vpop.f32.mrf.mxu0
    %v557 = vadd.f32 %v470, %v556
    %v558 = vpop.f32.mrf.mxu0
    %559 = vmatprep.mubr.bf16.mxu0 0
    %560 = vmatmul.mubr.bf16.gmra.mxu0 %v442
    %v561 = vpop.f32.mrf.mxu0
    %v562 = vadd.f32 %v470, %v561
    %v563 = vpop.f32.mrf.mxu0
    %v564 = vpop.f32.mrf.mxu0
    %v565 = vadd.f32 %v470, %v564
    %v566 = vpop.f32.mrf.mxu0
    %567 = vmatprep.mubr.bf16.mxu0 0
    %568 = vmatmul.mubr.bf16.gmra.mxu0 %v443
    %v569 = vpop.f32.mrf.mxu0
    %v570 = vadd.f32 %v470, %v569
    %v571 = vpop.f32.mrf.mxu0
    %v572 = vpop.f32.mrf.mxu0
    %v573 = vadd.f32 %v470, %v572
    %v574 = vpop.f32.mrf.mxu0
    %575 = vmatprep.mubr.bf16.mxu0 0
    %576 = vmatmul.mubr.bf16.gmra.mxu0 %v444
    %v577 = vpop.f32.mrf.mxu0
    %v578 = vadd.f32 %v470, %v577
    %v579 = vpop.f32.mrf.mxu0
    %v580 = vpop.f32.mrf.mxu0
    %v581 = vadd.f32 %v470, %v580
    %v582 = vpop.f32.mrf.mxu0
    %583 = vmatprep.mubr.bf16.mxu0 0
    %584 = vmatmul.mubr.bf16.gmra.mxu0 %v445
    %v585 = vpop.f32.mrf.mxu0
    %v586 = vadd.f32 %v470, %v585
    %v587 = vpop.f32.mrf.mxu0
    %v588 = vpop.f32.mrf.mxu0
    %v589 = vadd.f32 %v470, %v588
    %v590 = vpop.f32.mrf.mxu0
    %591 = vmatprep.mubr.bf16.mxu0 0
    %592 = vmatmul.mubr.bf16.gmra.mxu0 %v446
    %v593 = vpop.f32.mrf.mxu0
    %v594 = vadd.f32 %v470, %v593
    %v595 = vpop.f32.mrf.mxu0
    %v596 = vpop.f32.mrf.mxu0
    %v597 = vadd.f32 %v470, %v596
    %v598 = vpop.f32.mrf.mxu0
    %599 = vmatprep.mubr.bf16.mxu0 0
    %600 = vmatmul.mubr.bf16.gmra.mxu0 %v447
    %v601 = vpop.f32.mrf.mxu0
    %v602 = vadd.f32 %v470, %v601
    %v603 = vpop.f32.mrf.mxu0
    %v604 = vpop.f32.mrf.mxu0
    %v605 = vadd.f32 %v470, %v604
    %v606 = vpop.f32.mrf.mxu0
    %607 = vmatprep.mubr.bf16.mxu0 0
    %608 = vmatmul.mubr.bf16.gmra.mxu0 %v448
    %v609 = vpop.f32.mrf.mxu0
    %v610 = vadd.f32 %v470, %v609
    %v611 = vpop.f32.mrf.mxu0
    %v612 = vpop.f32.mrf.mxu0
    %v613 = vadd.f32 %v470, %v612
    %v614 = vpop.f32.mrf.mxu0
    %615 = vdwg.mxu0
    %v616 = vmax.f32 %v554, 0.0
    %v617 = vmax.f32 %v557, 0.0
    %v618 = vmax.f32 %v562, 0.0
    %v619 = vmax.f32 %v565, 0.0
    %v620 = vmax.f32 %v570, 0.0
    %v621 = vmax.f32 %v573, 0.0
    %v622 = vmax.f32 %v578, 0.0
    %v623 = vmax.f32 %v581, 0.0
    %v624 = vmax.f32 %v586, 0.0
    %v625 = vmax.f32 %v589, 0.0
    %v626 = vmax.f32 %v594, 0.0
    %v627 = vmax.f32 %v597, 0.0
    %v628 = vmax.f32 %v602, 0.0
    %v629 = vmax.f32 %v605, 0.0
    %v630 = vmax.f32 %v610, 0.0
    %v631 = vmax.f32 %v613, 0.0
    %v632 = vpack.c.bf16 %v617, %v616
    %v633 = vpack.c.bf16 %v619, %v618
    %v634 = vpack.c.bf16 %v621, %v620
    %v635 = vpack.c.bf16 %v623, %v622
    %v636 = vpack.c.bf16 %v625, %v624
    %v637 = vpack.c.bf16 %v627, %v626
    %v638 = vpack.c.bf16 %v629, %v628
    %v639 = vpack.c.bf16 %v631, %v630
    %s640 = scalar_lea.vmem [#allocation2], 128
    %v641 = vld [vmem:[%s640] sm:$0xf]
    %v642 = vld [vmem:[%s640 + $0x4] sm:$0xf]
    %v643 = vld [vmem:[%s640 + $0x8] sm:$0xf]
    %v644 = vld [vmem:[%s640 + $0xc] sm:$0xf]
    %v645 = vld [vmem:[%s640 + $0x10] sm:$0xf]
    %v646 = vld [vmem:[%s640 + $0x14] sm:$0xf]
    %v647 = vld [vmem:[%s640 + $0x18] sm:$0xf]
    %v648 = vld [vmem:[%s640 + $0x1c] sm:$0xf]
    %v649 = vld [vmem:[%s640 + $0x20] sm:$0xf]
    %v650 = vld [vmem:[%s640 + $0x24] sm:$0xf]
    %v651 = vld [vmem:[%s640 + $0x28] sm:$0xf]
    %v652 = vld [vmem:[%s640 + $0x2c] sm:$0xf]
    %v653 = vld [vmem:[%s640 + $0x30] sm:$0xf]
    %v654 = vld [vmem:[%s640 + $0x34] sm:$0xf]
    %v655 = vld [vmem:[%s640 + $0x38] sm:$0xf]
    %v656 = vld [vmem:[%s640 + $0x3c] sm:$0xf]
    %v657 = vld [vmem:[%s4 + $0x3] sm:$0x1]
    %v658 = vlaneseq
    %v659 = vshrl.u32 %v658, 7
    %v660 = vsub.s32 0, %v659
    %v661 = vrot.slane %v657, %v660
    %v678 = vunpack.c.l.b16 %v641
    %v679 = vunpack.c.l.b16 %v642
    %v680 = vunpack.c.l.b16 %v643
    %v681 = vunpack.c.l.b16 %v644
    %v682 = vunpack.c.l.b16 %v645
    %v683 = vunpack.c.l.b16 %v646
    %v684 = vunpack.c.l.b16 %v647
    %v685 = vunpack.c.l.b16 %v648
    %v686 = vunpack.c.l.b16 %v649
    %v687 = vunpack.c.l.b16 %v650
    %v688 = vunpack.c.l.b16 %v651
    %v689 = vunpack.c.l.b16 %v652
    %v690 = vunpack.c.l.b16 %v653
    %v691 = vunpack.c.l.b16 %v654
    %v692 = vunpack.c.l.b16 %v655
    %v693 = vunpack.c.l.b16 %v656
    %v694 = vpack.c.b16 %v679, %v678
    %v695 = vpack.c.b16 %v681, %v680
    %v696 = vpack.c.b16 %v683, %v682
    %v697 = vpack.c.b16 %v685, %v684
    %v698 = vpack.c.b16 %v687, %v686
    %v699 = vpack.c.b16 %v689, %v688
    %v700 = vpack.c.b16 %v691, %v690
    %v701 = vpack.c.b16 %v693, %v692
    %710 = vmatprep.subr.bf16.mxu0 0
    %711 = vmatpush1.bf16.msra.mxu0 %v701
    %712 = vmatprep.subr.bf16.mxu0 0
    %713 = vmatpush1.bf16.msra.mxu0 %v700
    %714 = vmatprep.subr.bf16.mxu0 0
    %715 = vmatpush1.bf16.msra.mxu0 %v699
    %716 = vmatprep.subr.bf16.mxu0 0
    %717 = vmatpush1.bf16.msra.mxu0 %v698
    %718 = vmatprep.subr.bf16.mxu0 0
    %719 = vmatpush1.bf16.msra.mxu0 %v697
    %720 = vmatprep.subr.bf16.mxu0 0
    %721 = vmatpush1.bf16.msra.mxu0 %v696
    %722 = vmatprep.subr.bf16.mxu0 0
    %723 = vmatpush1.bf16.msra.mxu0 %v695
    %724 = vmatprep.subr.bf16.mxu0 0
    %725 = vmatpush1.bf16.msra.mxu0 %v694
    %726 = vmatprep.subr.bf16.mxu0 0
    %727 = vmatpush2.bf16.msra.mxu0 0
    %728 = vmatprep.subr.bf16.mxu0 0
    %729 = vmatpush2.bf16.msra.mxu0 0
    %730 = vmatprep.subr.bf16.mxu0 0
    %731 = vmatpush2.bf16.msra.mxu0 0
    %732 = vmatprep.subr.bf16.mxu0 0
    %733 = vmatpush2.bf16.msra.mxu0 0
    %734 = vmatprep.subr.bf16.mxu0 0
    %735 = vmatpush2.bf16.msra.mxu0 0
    %736 = vmatprep.subr.bf16.mxu0 0
    %737 = vmatpush2.bf16.msra.mxu0 0
    %738 = vmatprep.subr.bf16.mxu0 0
    %739 = vmatpush2.bf16.msra.mxu0 0
    %740 = vmatprep.subr.bf16.mxu0 0
    %741 = vmatpush2.bf16.msra.mxu0 0
    %742 = vmatprep.mubr.bf16.mxu0 0
    %743 = vmatmul.mubr.bf16.gmra.mxu0 %v632
    %v744 = vpop.f32.mrf.mxu0
    %v745 = vadd.f32 %v661, %v744
    %v746 = vpop.f32.mrf.mxu0
    %v747 = vpop.f32.mrf.mxu0
    %v748 = vadd.f32 %v661, %v747
    %v749 = vpop.f32.mrf.mxu0
    %750 = vmatprep.mubr.bf16.mxu0 0
    %751 = vmatmul.mubr.bf16.gmra.mxu0 %v633
    %v752 = vpop.f32.mrf.mxu0
    %v753 = vadd.f32 %v661, %v752
    %v754 = vpop.f32.mrf.mxu0
    %v755 = vpop.f32.mrf.mxu0
    %v756 = vadd.f32 %v661, %v755
    %v757 = vpop.f32.mrf.mxu0
    %758 = vmatprep.mubr.bf16.mxu0 0
    %759 = vmatmul.mubr.bf16.gmra.mxu0 %v634
    %v760 = vpop.f32.mrf.mxu0
    %v761 = vadd.f32 %v661, %v760
    %v762 = vpop.f32.mrf.mxu0
    %v763 = vpop.f32.mrf.mxu0
    %v764 = vadd.f32 %v661, %v763
    %v765 = vpop.f32.mrf.mxu0
    %766 = vmatprep.mubr.bf16.mxu0 0
    %767 = vmatmul.mubr.bf16.gmra.mxu0 %v635
    %v768 = vpop.f32.mrf.mxu0
    %v769 = vadd.f32 %v661, %v768
    %v770 = vpop.f32.mrf.mxu0
    %v771 = vpop.f32.mrf.mxu0
    %v772 = vadd.f32 %v661, %v771
    %v773 = vpop.f32.mrf.mxu0
    %774 = vmatprep.mubr.bf16.mxu0 0
    %775 = vmatmul.mubr.bf16.gmra.mxu0 %v636
    %v776 = vpop.f32.mrf.mxu0
    %v777 = vadd.f32 %v661, %v776
    %v778 = vpop.f32.mrf.mxu0
    %v779 = vpop.f32.mrf.mxu0
    %v780 = vadd.f32 %v661, %v779
    %v781 = vpop.f32.mrf.mxu0
    %782 = vmatprep.mubr.bf16.mxu0 0
    %783 = vmatmul.mubr.bf16.gmra.mxu0 %v637
    %v784 = vpop.f32.mrf.mxu0
    %v785 = vadd.f32 %v661, %v784
    %v786 = vpop.f32.mrf.mxu0
    %v787 = vpop.f32.mrf.mxu0
    %v788 = vadd.f32 %v661, %v787
    %v789 = vpop.f32.mrf.mxu0
    %790 = vmatprep.mubr.bf16.mxu0 0
    %791 = vmatmul.mubr.bf16.gmra.mxu0 %v638
    %v792 = vpop.f32.mrf.mxu0
    %v793 = vadd.f32 %v661, %v792
    %v794 = vpop.f32.mrf.mxu0
    %v795 = vpop.f32.mrf.mxu0
    %v796 = vadd.f32 %v661, %v795
    %v797 = vpop.f32.mrf.mxu0
    %798 = vmatprep.mubr.bf16.mxu0 0
    %799 = vmatmul.mubr.bf16.gmra.mxu0 %v639
    %v800 = vpop.f32.mrf.mxu0
    %v801 = vadd.f32 %v661, %v800
    %v802 = vpop.f32.mrf.mxu0
    %v803 = vpop.f32.mrf.mxu0
    %v804 = vadd.f32 %v661, %v803
    %v805 = vpop.f32.mrf.mxu0
    %806 = vdwg.mxu0
    %v807 = vmax.f32 %v745, 0.0
    %v808 = vmax.f32 %v748, 0.0
    %v809 = vmax.f32 %v753, 0.0
    %v810 = vmax.f32 %v756, 0.0
    %v811 = vmax.f32 %v761, 0.0
    %v812 = vmax.f32 %v764, 0.0
    %v813 = vmax.f32 %v769, 0.0
    %v814 = vmax.f32 %v772, 0.0
    %v815 = vmax.f32 %v777, 0.0
    %v816 = vmax.f32 %v780, 0.0
    %v817 = vmax.f32 %v785, 0.0
    %v818 = vmax.f32 %v788, 0.0
    %v819 = vmax.f32 %v793, 0.0
    %v820 = vmax.f32 %v796, 0.0
    %v821 = vmax.f32 %v801, 0.0
    %v822 = vmax.f32 %v804, 0.0
    %v823 = vpack.c.bf16 %v808, %v807
    %v824 = vpack.c.bf16 %v810, %v809
    %v825 = vpack.c.bf16 %v812, %v811
    %v826 = vpack.c.bf16 %v814, %v813
    %v827 = vpack.c.bf16 %v816, %v815
    %v828 = vpack.c.bf16 %v818, %v817
    %v829 = vpack.c.bf16 %v820, %v819
    %v830 = vpack.c.bf16 %v822, %v821
    %s831 = scalar_lea.vmem [#allocation2], 192
    %v832 = vld [vmem:[%s831] sm:$0xf]
    %v833 = vld [vmem:[%s831 + $0x4] sm:$0xf]
    %v834 = vld [vmem:[%s831 + $0x8] sm:$0xf]
    %v835 = vld [vmem:[%s831 + $0xc] sm:$0xf]
    %v836 = vld [vmem:[%s831 + $0x10] sm:$0xf]
    %v837 = vld [vmem:[%s831 + $0x14] sm:$0xf]
    %v838 = vld [vmem:[%s831 + $0x18] sm:$0xf]
    %v839 = vld [vmem:[%s831 + $0x1c] sm:$0xf]
    %v840 = vld [vmem:[%s831 + $0x20] sm:$0xf]
    %v841 = vld [vmem:[%s831 + $0x24] sm:$0xf]
    %v842 = vld [vmem:[%s831 + $0x28] sm:$0xf]
    %v843 = vld [vmem:[%s831 + $0x2c] sm:$0xf]
    %v844 = vld [vmem:[%s831 + $0x30] sm:$0xf]
    %v845 = vld [vmem:[%s831 + $0x34] sm:$0xf]
    %v846 = vld [vmem:[%s831 + $0x38] sm:$0xf]
    %v847 = vld [vmem:[%s831 + $0x3c] sm:$0xf]
    %v848 = vld [vmem:[%s4 + $0x4] sm:$0x1]
    %v849 = vlaneseq
    %v850 = vshrl.u32 %v849, 7
    %v851 = vsub.s32 0, %v850
    %v852 = vrot.slane %v848, %v851
    %v869 = vunpack.c.l.b16 %v832
    %v870 = vunpack.c.l.b16 %v833
    %v871 = vunpack.c.l.b16 %v834
    %v872 = vunpack.c.l.b16 %v835
    %v873 = vunpack.c.l.b16 %v836
    %v874 = vunpack.c.l.b16 %v837
    %v875 = vunpack.c.l.b16 %v838
    %v876 = vunpack.c.l.b16 %v839
    %v877 = vunpack.c.l.b16 %v840
    %v878 = vunpack.c.l.b16 %v841
    %v879 = vunpack.c.l.b16 %v842
    %v880 = vunpack.c.l.b16 %v843
    %v881 = vunpack.c.l.b16 %v844
    %v882 = vunpack.c.l.b16 %v845
    %v883 = vunpack.c.l.b16 %v846
    %v884 = vunpack.c.l.b16 %v847
    %v885 = vpack.c.b16 %v870, %v869
    %v886 = vpack.c.b16 %v872, %v871
    %v887 = vpack.c.b16 %v874, %v873
    %v888 = vpack.c.b16 %v876, %v875
    %v889 = vpack.c.b16 %v878, %v877
    %v890 = vpack.c.b16 %v880, %v879
    %v891 = vpack.c.b16 %v882, %v881
    %v892 = vpack.c.b16 %v884, %v883
    %901 = vmatprep.subr.bf16.mxu0 0
    %902 = vmatpush1.bf16.msra.mxu0 %v892
    %903 = vmatprep.subr.bf16.mxu0 0
    %904 = vmatpush1.bf16.msra.mxu0 %v891
    %905 = vmatprep.subr.bf16.mxu0 0
    %906 = vmatpush1.bf16.msra.mxu0 %v890
    %907 = vmatprep.subr.bf16.mxu0 0
    %908 = vmatpush1.bf16.msra.mxu0 %v889
    %909 = vmatprep.subr.bf16.mxu0 0
    %910 = vmatpush1.bf16.msra.mxu0 %v888
    %911 = vmatprep.subr.bf16.mxu0 0
    %912 = vmatpush1.bf16.msra.mxu0 %v887
    %913 = vmatprep.subr.bf16.mxu0 0
    %914 = vmatpush1.bf16.msra.mxu0 %v886
    %915 = vmatprep.subr.bf16.mxu0 0
    %916 = vmatpush1.bf16.msra.mxu0 %v885
    %917 = vmatprep.subr.bf16.mxu0 0
    %918 = vmatpush2.bf16.msra.mxu0 0
    %919 = vmatprep.subr.bf16.mxu0 0
    %920 = vmatpush2.bf16.msra.mxu0 0
    %921 = vmatprep.subr.bf16.mxu0 0
    %922 = vmatpush2.bf16.msra.mxu0 0
    %923 = vmatprep.subr.bf16.mxu0 0
    %924 = vmatpush2.bf16.msra.mxu0 0
    %925 = vmatprep.subr.bf16.mxu0 0
    %926 = vmatpush2.bf16.msra.mxu0 0
    %927 = vmatprep.subr.bf16.mxu0 0
    %928 = vmatpush2.bf16.msra.mxu0 0
    %929 = vmatprep.subr.bf16.mxu0 0
    %930 = vmatpush2.bf16.msra.mxu0 0
    %931 = vmatprep.subr.bf16.mxu0 0
    %932 = vmatpush2.bf16.msra.mxu0 0
    %933 = vmatprep.mubr.bf16.mxu0 0
    %934 = vmatmul.mubr.bf16.gmra.mxu0 %v823
    %v935 = vpop.f32.mrf.mxu0
    %v936 = vadd.f32 %v852, %v935
    %v937 = vpop.f32.mrf.mxu0
    %v938 = vpop.f32.mrf.mxu0
    %v939 = vadd.f32 %v852, %v938
    %v940 = vpop.f32.mrf.mxu0
    %941 = vmatprep.mubr.bf16.mxu0 0
    %942 = vmatmul.mubr.bf16.gmra.mxu0 %v824
    %v943 = vpop.f32.mrf.mxu0
    %v944 = vadd.f32 %v852, %v943
    %v945 = vpop.f32.mrf.mxu0
    %v946 = vpop.f32.mrf.mxu0
    %v947 = vadd.f32 %v852, %v946
    %v948 = vpop.f32.mrf.mxu0
    %949 = vmatprep.mubr.bf16.mxu0 0
    %950 = vmatmul.mubr.bf16.gmra.mxu0 %v825
    %v951 = vpop.f32.mrf.mxu0
    %v952 = vadd.f32 %v852, %v951
    %v953 = vpop.f32.mrf.mxu0
    %v954 = vpop.f32.mrf.mxu0
    %v955 = vadd.f32 %v852, %v954
    %v956 = vpop.f32.mrf.mxu0
    %957 = vmatprep.mubr.bf16.mxu0 0
    %958 = vmatmul.mubr.bf16.gmra.mxu0 %v826
    %v959 = vpop.f32.mrf.mxu0
    %v960 = vadd.f32 %v852, %v959
    %v961 = vpop.f32.mrf.mxu0
    %v962 = vpop.f32.mrf.mxu0
    %v963 = vadd.f32 %v852, %v962
    %v964 = vpop.f32.mrf.mxu0
    %965 = vmatprep.mubr.bf16.mxu0 0
    %966 = vmatmul.mubr.bf16.gmra.mxu0 %v827
    %v967 = vpop.f32.mrf.mxu0
    %v968 = vadd.f32 %v852, %v967
    %v969 = vpop.f32.mrf.mxu0
    %v970 = vpop.f32.mrf.mxu0
    %v971 = vadd.f32 %v852, %v970
    %v972 = vpop.f32.mrf.mxu0
    %973 = vmatprep.mubr.bf16.mxu0 0
    %974 = vmatmul.mubr.bf16.gmra.mxu0 %v828
    %v975 = vpop.f32.mrf.mxu0
    %v976 = vadd.f32 %v852, %v975
    %v977 = vpop.f32.mrf.mxu0
    %v978 = vpop.f32.mrf.mxu0
    %v979 = vadd.f32 %v852, %v978
    %v980 = vpop.f32.mrf.mxu0
    %981 = vmatprep.mubr.bf16.mxu0 0
    %982 = vmatmul.mubr.bf16.gmra.mxu0 %v829
    %v983 = vpop.f32.mrf.mxu0
    %v984 = vadd.f32 %v852, %v983
    %v985 = vpop.f32.mrf.mxu0
    %v986 = vpop.f32.mrf.mxu0
    %v987 = vadd.f32 %v852, %v986
    %v988 = vpop.f32.mrf.mxu0
    %989 = vmatprep.mubr.bf16.mxu0 0
    %990 = vmatmul.mubr.bf16.gmra.mxu0 %v830
    %v991 = vpop.f32.mrf.mxu0
    %v992 = vadd.f32 %v852, %v991
    %v993 = vpop.f32.mrf.mxu0
    %v994 = vpop.f32.mrf.mxu0
    %v995 = vadd.f32 %v852, %v994
    %v996 = vpop.f32.mrf.mxu0
    %997 = vdwg.mxu0
    %v998 = vmax.f32 %v936, 0.0
    %v999 = vmax.f32 %v939, 0.0
    %v1000 = vmax.f32 %v944, 0.0
    %v1001 = vmax.f32 %v947, 0.0
    %v1002 = vmax.f32 %v952, 0.0
    %v1003 = vmax.f32 %v955, 0.0
    %v1004 = vmax.f32 %v960, 0.0
    %v1005 = vmax.f32 %v963, 0.0
    %v1006 = vmax.f32 %v968, 0.0
    %v1007 = vmax.f32 %v971, 0.0
    %v1008 = vmax.f32 %v976, 0.0
    %v1009 = vmax.f32 %v979, 0.0
    %v1010 = vmax.f32 %v984, 0.0
    %v1011 = vmax.f32 %v987, 0.0
    %v1012 = vmax.f32 %v992, 0.0
    %v1013 = vmax.f32 %v995, 0.0
    %v1014 = vpack.c.bf16 %v999, %v998
    %v1015 = vpack.c.bf16 %v1001, %v1000
    %v1016 = vpack.c.bf16 %v1003, %v1002
    %v1017 = vpack.c.bf16 %v1005, %v1004
    %v1018 = vpack.c.bf16 %v1007, %v1006
    %v1019 = vpack.c.bf16 %v1009, %v1008
    %v1020 = vpack.c.bf16 %v1011, %v1010
    %v1021 = vpack.c.bf16 %v1013, %v1012
    %v1022 = vld [vmem:[%s3] sm:$0x1]
    %v1023 = vld [vmem:[%s4 + $0x5] sm:$0x1]
    %1025 = vset.pattern.permute.xlu0 0
    %1026 = vperm.xlu0 %1025, %v1023
    %v1027 = vpop.permute.xlu0 %1026
    %1029 = vmatprep.subr.bf16.mxu0 0
    %1030 = vmatpush1.bf16.xpose.msra.mxu0 %v1021
    %1031 = vmatprep.subr.bf16.mxu0 0
    %1032 = vmatpush1.bf16.xpose.msra.mxu0 %v1020
    %1033 = vmatprep.subr.bf16.mxu0 0
    %1034 = vmatpush1.bf16.xpose.msra.mxu0 %v1019
    %1035 = vmatprep.subr.bf16.mxu0 0
    %1036 = vmatpush1.bf16.xpose.msra.mxu0 %v1018
    %1037 = vmatprep.subr.bf16.mxu0 0
    %1038 = vmatpush1.bf16.xpose.msra.mxu0 %v1017
    %1039 = vmatprep.subr.bf16.mxu0 0
    %1040 = vmatpush1.bf16.xpose.msra.mxu0 %v1016
    %1041 = vmatprep.subr.bf16.mxu0 0
    %1042 = vmatpush1.bf16.xpose.msra.mxu0 %v1015
    %1043 = vmatprep.subr.bf16.mxu0 0
    %1044 = vmatpush1.bf16.xpose.msra.mxu0 %v1014
    %1045 = vmatprep.subr.bf16.mxu0 0
    %1046 = vmatpush2.bf16.xpose.msra.mxu0 0
    %1047 = vmatprep.subr.bf16.mxu0 0
    %1048 = vmatpush2.bf16.xpose.msra.mxu0 0
    %1049 = vmatprep.subr.bf16.mxu0 0
    %1050 = vmatpush2.bf16.xpose.msra.mxu0 0
    %1051 = vmatprep.subr.bf16.mxu0 0
    %1052 = vmatpush2.bf16.xpose.msra.mxu0 0
    %1053 = vmatprep.subr.bf16.mxu0 0
    %1054 = vmatpush2.bf16.xpose.msra.mxu0 0
    %1055 = vmatprep.subr.bf16.mxu0 0
    %1056 = vmatpush2.bf16.xpose.msra.mxu0 0
    %1057 = vmatprep.subr.bf16.mxu0 0
    %1058 = vmatpush2.bf16.xpose.msra.mxu0 0
    %1059 = vmatprep.subr.bf16.mxu0 0
    %1060 = vmatpush2.bf16.xpose.msra.mxu0 0
    %1061 = vmatprep.mubr.bf16.mxu0 0
    %1062 = vmatmul.mubr.bf16.gmra.mxu0 %v1022
    %v1063 = vpop.f32.mrf.mxu0
    %v1064 = vadd.f32 %v1027, %v1063
    %v1065 = vpop.f32.mrf.mxu0
    %v1066 = vpop.f32.mrf.mxu0
    %v1067 = vpop.f32.mrf.mxu0
    %1068 = vdwg.mxu0
    %1069 = vst [vmem:[#allocation5] sm:$0x1] %v1064
    // Predicated region
    $region26: #{tpu_custom_call.1} parent=1 // pred_check
      _
    $region27: #{tpu_custom_call.1} parent=1 // pred_check_branch
      %1071 = sbr.rel (0) target = $region29
    $region28: #{tpu_custom_call.1} parent=1 // pred_region
      %s1073 = ssub.s32 16, 16
      %1074 = vsyncadd [#allocation4], %s1073
      %s1076 = sshll.u32 [#allocation5], 4
      %s1077 = int_to_ptr.vmem [resolvable:$true] %s1076
      %1079 = dma.vmem_to_hbm [thread:$0]  %s1077, 16, %s5, [#allocation4]
    $region29: #{tpu_custom_call.1} parent=1 // pred_fallthru
      _
    // Predicated region
    $region30: #{tpu_custom_call.1} parent=1 // pred_check
      _
    $region31: #{tpu_custom_call.1} parent=1 // pred_check_branch
      %1081 = sbr.rel (0) target = $region33
    $region32: #{tpu_custom_call.1} parent=1 // pred_region
      %1082 = dma.done [#allocation4], 16
    $region33: #{tpu_custom_call.1} parent=1 // pred_fallthru
      _
    %1083 = vsyncpa [#allocation3], 1
    %1084 = vsyncpa [#allocation4], 1

</llo_original>
